<compile_context>
chip_gen: v7x
topology: tpu7x:2x2x1
jax: 0.10.0
libtpu: 0.0.40
codegen_flags: <defaults>
</compile_context>

<pallas_src>
import jax
import jax.numpy as jnp
import numpy as np
from jax.experimental import pallas as pl
from jax.experimental.pallas import tpu as pltpu


def _round_up(n, m):
    return ((n + m - 1) // m) * m


def circular_embedding_kernel(x_ref, wr_ref, ws_ref, wc_ref, b_ref, o_ref):
    # x: (TM, F)   w*: (F, O)   b: (1, O)   o: (TM, O)
    x = x_ref[...].astype(jnp.float32)
    acc = jnp.dot(x, wr_ref[...], preferred_element_type=jnp.float32)
    acc = acc + jnp.dot(jnp.sin(x), ws_ref[...], preferred_element_type=jnp.float32)
    acc = acc + jnp.dot(jnp.cos(x), wc_ref[...], preferred_element_type=jnp.float32)
    o_ref[...] = (acc + b_ref[...]).astype(o_ref.dtype)


def make_circular_embedding_params(weight, bias, circular_indices, in_features):
    """One-time parameter prep (hoisted out of the per-call path).

    weight: (out_features, n_rem + 2*n_circ) in PyTorch nn.Linear layout, columns
    ordered [remaining, sin, cos] where `remaining` is the sorted complement of
    circular_indices; bias: (out_features,).  The columns are scattered into three
    (in_features, out_features) slabs addressed by ORIGINAL feature position so the
    kernel can consume a contiguous x tile directly.
    """
    circ = list(circular_indices) if circular_indices is not None else []
    n_circ = len(circ)
    idx_rem = [i for i in range(in_features) if i not in circ]
    n_rem = len(idx_rem)
    out_features = weight.shape[0]
    F = in_features

    w = jnp.asarray(weight, dtype=jnp.float32)
    w_rem = jnp.zeros((F, out_features), jnp.float32)
    w_sin = jnp.zeros((F, out_features), jnp.float32)
    w_cos = jnp.zeros((F, out_features), jnp.float32)
    if n_rem > 0:
        w_rem = w_rem.at[jnp.asarray(idx_rem, jnp.int32), :].set(w[:, :n_rem].T)
    if n_circ > 0:
        circ_arr = jnp.asarray(circ, jnp.int32)
        w_sin = w_sin.at[circ_arr, :].set(w[:, n_rem:n_rem + n_circ].T)
        w_cos = w_cos.at[circ_arr, :].set(w[:, n_rem + n_circ:].T)
    b = jnp.asarray(bias, jnp.float32).reshape(1, out_features)
    return {"w_rem": w_rem, "w_sin": w_sin, "w_cos": w_cos, "bias": b,
            "in_features": F, "out_features": out_features}


def circular_embedding_apply(x, params, *, tile_m=2048, min_pallas_rows=2048):
    """x: (..., in_features) -> (..., out_features)."""
    F = params["in_features"]
    O = params["out_features"]
    assert x.shape[-1] == F
    lead = x.shape[:-1]
    M = int(np.prod(lead)) if lead else 1
    x2 = x.reshape(M, F)

    w_rem, w_sin, w_cos, b = (params["w_rem"], params["w_sin"],
                              params["w_cos"], params["bias"])

    if M < min_pallas_rows:
        # Latency-bound small-M fast path: plain XLA fuses sin/cos/matmul, no grid overhead.
        xf = x2.astype(jnp.float32)
        out = (jnp.dot(xf, w_rem) + jnp.dot(jnp.sin(xf), w_sin)
               + jnp.dot(jnp.cos(xf), w_cos) + b).astype(x.dtype)
        return out.reshape(*lead, O)

    tile_m = max(8, (int(tile_m) // 8) * 8)
    # Cap TM at ceil(M/2) (multiple of 8) so the grid has >= 2 steps -> both v7x
    # TensorCores get rows under dimension_semantics=("parallel",).
    TM = min(tile_m, max(8, _round_up(pl.cdiv(M, 2), 8)))
    grid = (pl.cdiv(M, TM),)  # ragged last tile: OOB reads ignored, OOB writes masked

    out = pl.pallas_call(
        circular_embedding_kernel,
        out_shape=jax.ShapeDtypeStruct((M, O), x.dtype),
        grid_spec=pltpu.PrefetchScalarGridSpec(
            num_scalar_prefetch=0,
            grid=grid,
            in_specs=[
                pl.BlockSpec((TM, F), lambda i: (i, 0)),   # streamed x row tile
                pl.BlockSpec((F, O), lambda i: (0, 0)),    # resident weight slabs
                pl.BlockSpec((F, O), lambda i: (0, 0)),
                pl.BlockSpec((F, O), lambda i: (0, 0)),
                pl.BlockSpec((1, O), lambda i: (0, 0)),    # resident bias
            ],
            out_specs=pl.BlockSpec((TM, O), lambda i: (i, 0)),
        ),
        compiler_params=pltpu.CompilerParams(
            dimension_semantics=("parallel",)),
    )(x2, w_rem, w_sin, w_cos, b)
    return out.reshape(*lead, O)


def circular_embedding(x, weight, bias, circular_indices, in_features, **kwargs):
    """Convenience wrapper: prep params + apply (prefer hoisting the prep in real use)."""
    params = make_circular_embedding_params(weight, bias, circular_indices, in_features)
    return circular_embedding_apply(x, params, **kwargs)


def reference(x, weight, bias, circular_indices, in_features):
    circ = list(circular_indices)
    idx_rem = [i for i in range(in_features) if i not in circ]
    xc = x[..., np.array(circ)]
    xr = x[..., np.array(idx_rem)]
    xcat = jnp.concatenate([xr, jnp.sin(xc), jnp.cos(xc)], axis=-1)
    return xcat @ weight.T + bias


if __name__ == "__main__":
    in_features = 6
    out_features = 32
    circular_indices = [2, 5]
    n_circ = len(circular_indices)

    key = jax.random.PRNGKey(0)
    kx, kw, kb, kx2 = jax.random.split(key, 4)

    # deterministic "Linear" params: weight (out, n_rem + 2*n_circ), bias (out,)
    fan_in = in_features + n_circ
    bound = 1.0 / np.sqrt(fan_in)
    weight = jax.random.uniform(kw, (out_features, fan_in), jnp.float32, -bound, bound)
    bias = jax.random.uniform(kb, (out_features,), jnp.float32, -bound, bound)

    params = make_circular_embedding_params(weight, bias, circular_indices, in_features)

    # --- small demo shape (B=2, S=8 -> M=16): force the Pallas path -----------------
    B, S = 2, 8
    x = jax.random.normal(kx, (B, S, in_features), dtype=jnp.float32)
    ref = reference(x, weight, bias, circular_indices, in_features)
    out = jax.block_until_ready(circular_embedding_apply(x, params, min_pallas_rows=0))
    assert out.shape == (B, S, out_features)
    np.testing.assert_allclose(np.asarray(out), np.asarray(ref), rtol=1e-5, atol=1e-5)

    # --- ragged-grid path (M=210, TM=112 -> 2 tiles, last tile partially masked) ----
    B2, S2 = 2, 105
    xr = jax.random.normal(kx2, (B2, S2, in_features), dtype=jnp.float32)
    ref2 = reference(xr, weight, bias, circular_indices, in_features)
    out2 = jax.block_until_ready(circular_embedding_apply(xr, params, min_pallas_rows=0))
    np.testing.assert_allclose(np.asarray(out2), np.asarray(ref2), rtol=1e-5, atol=1e-5)

    # --- small-M XLA fast path (default threshold) -----------------------------------
    out3 = jax.block_until_ready(circular_embedding_apply(x, params))
    np.testing.assert_allclose(np.asarray(out3), np.asarray(ref), rtol=1e-5, atol=1e-5)

    print("KERNEL_OK")
</pallas_src>

<mosaic_0001>
module attributes {stable_mosaic.version = 11 : i64} {
  func.func @circular_embedding_kernel(%arg0: i32, %arg1: memref<8x6xf32, #tpu.memory_space<vmem>>, %arg2: memref<6x32xf32, #tpu.memory_space<vmem>>, %arg3: memref<6x32xf32, #tpu.memory_space<vmem>>, %arg4: memref<6x32xf32, #tpu.memory_space<vmem>>, %arg5: memref<1x32xf32, #tpu.memory_space<vmem>>, %arg6: memref<8x32xf32, #tpu.memory_space<vmem>>) attributes {dimension_semantics = [#tpu.dimension_semantics<parallel>], iteration_bounds = array<i64: 2>, scalar_prefetch = 0 : i64, scratch_operands = 0 : i64, tpu.core_type = #tpu.core_type<tc>, window_params = [{transform_indices = @transform_0, window_bounds = array<i64: 8, 6>}, {pipeline_mode = #tpu.pipeline_mode<synchronous>, transform_indices = @transform_1, window_bounds = array<i64: 6, 32>}, {pipeline_mode = #tpu.pipeline_mode<synchronous>, transform_indices = @transform_2, window_bounds = array<i64: 6, 32>}, {pipeline_mode = #tpu.pipeline_mode<synchronous>, transform_indices = @transform_3, window_bounds = array<i64: 6, 32>}, {pipeline_mode = #tpu.pipeline_mode<synchronous>, transform_indices = @transform_4, window_bounds = array<i64: 1, 32>}, {transform_indices = @transform_5, window_bounds = array<i64: 8, 32>}]} {
    %c0 = arith.constant 0 : index
    %c0_0 = arith.constant 0 : index
    %0 = vector.load %arg1[%c0, %c0_0] : memref<8x6xf32, #tpu.memory_space<vmem>>, vector<8x6xf32>
    %c0_1 = arith.constant 0 : index
    %c0_2 = arith.constant 0 : index
    %1 = vector.load %arg2[%c0_1, %c0_2] : memref<6x32xf32, #tpu.memory_space<vmem>>, vector<6x32xf32>
    %cst = arith.constant dense<0.000000e+00> : vector<8x32xf32>
    %2 = tpu.matmul %0, %1, %cst {dimension_numbers = #tpu.dot_dimension_numbers<[1], [0], [0], [1], [0, 0, 1, 1], [], []>} : vector<8x6xf32>, vector<6x32xf32>, vector<8x32xf32> -> vector<8x32xf32>
    %3 = math.sin %0 : vector<8x6xf32>
    %c0_3 = arith.constant 0 : index
    %c0_4 = arith.constant 0 : index
    %4 = vector.load %arg3[%c0_3, %c0_4] : memref<6x32xf32, #tpu.memory_space<vmem>>, vector<6x32xf32>
    %cst_5 = arith.constant dense<0.000000e+00> : vector<8x32xf32>
    %5 = tpu.matmul %3, %4, %cst_5 {dimension_numbers = #tpu.dot_dimension_numbers<[1], [0], [0], [1], [0, 0, 1, 1], [], []>} : vector<8x6xf32>, vector<6x32xf32>, vector<8x32xf32> -> vector<8x32xf32>
    %6 = arith.addf %2, %5 : vector<8x32xf32>
    %7 = math.cos %0 : vector<8x6xf32>
    %c0_6 = arith.constant 0 : index
    %c0_7 = arith.constant 0 : index
    %8 = vector.load %arg4[%c0_6, %c0_7] : memref<6x32xf32, #tpu.memory_space<vmem>>, vector<6x32xf32>
    %cst_8 = arith.constant dense<0.000000e+00> : vector<8x32xf32>
    %9 = tpu.matmul %7, %8, %cst_8 {dimension_numbers = #tpu.dot_dimension_numbers<[1], [0], [0], [1], [0, 0, 1, 1], [], []>} : vector<8x6xf32>, vector<6x32xf32>, vector<8x32xf32> -> vector<8x32xf32>
    %10 = arith.addf %6, %9 : vector<8x32xf32>
    %c0_9 = arith.constant 0 : index
    %c0_10 = arith.constant 0 : index
    %11 = vector.load %arg5[%c0_9, %c0_10] : memref<1x32xf32, #tpu.memory_space<vmem>>, vector<1x32xf32>
    %12 = vector.broadcast %11 : vector<1x32xf32> to vector<8x32xf32>
    %13 = arith.addf %10, %12 : vector<8x32xf32>
    %c0_11 = arith.constant 0 : index
    %c0_12 = arith.constant 0 : index
    %14 = vector.load %arg6[%c0_11, %c0_12] : memref<8x32xf32, #tpu.memory_space<vmem>>, vector<8x32xf32>
    tpu.vector_store %arg6[%c0_11, %c0_12], %13 {strides = array<i32>} : memref<8x32xf32, #tpu.memory_space<vmem>>, vector<8x32xf32>,
    return
  }
  func.func @transform_0(%arg0: i32) -> (i32, i32) {
    %c0_i32 = arith.constant 0 : i32
    %c0_i32_0 = arith.constant 0 : i32
    return %arg0, %c0_i32 : i32, i32
  }
  func.func @transform_1(%arg0: i32) -> (i32, i32) {
    %c0_i32 = arith.constant 0 : i32
    %c0_i32_0 = arith.constant 0 : i32
    %c0_i32_1 = arith.constant 0 : i32
    return %c0_i32, %c0_i32_0 : i32, i32
  }
  func.func @transform_2(%arg0: i32) -> (i32, i32) {
    %c0_i32 = arith.constant 0 : i32
    %c0_i32_0 = arith.constant 0 : i32
    %c0_i32_1 = arith.constant 0 : i32
    return %c0_i32, %c0_i32_0 : i32, i32
  }
  func.func @transform_3(%arg0: i32) -> (i32, i32) {
    %c0_i32 = arith.constant 0 : i32
    %c0_i32_0 = arith.constant 0 : i32
    %c0_i32_1 = arith.constant 0 : i32
    return %c0_i32, %c0_i32_0 : i32, i32
  }
  func.func @transform_4(%arg0: i32) -> (i32, i32) {
    %c0_i32 = arith.constant 0 : i32
    %c0_i32_0 = arith.constant 0 : i32
    %c0_i32_1 = arith.constant 0 : i32
    return %c0_i32, %c0_i32_0 : i32, i32
  }
  func.func @transform_5(%arg0: i32) -> (i32, i32) {
    %c0_i32 = arith.constant 0 : i32
    %c0_i32_0 = arith.constant 0 : i32
    return %arg0, %c0_i32 : i32, i32
  }
}

</mosaic_0001>

<llo_original>
// kernel: tpu_custom_call.1
$region0: #{tpu_custom_call.1}
  #allocation0 [shape = 'u32[]', space=smem, size = 0x4, offset = 0x4, fixed_abs, tag = 'smem constant byte address 0x4 - core index']
  #allocation1 [shape = 'u32[144,128]{1,0:T(1,128)}', space=vmem, size = 0x12000, scoped, tag = 'internal scratch']
  %s0 = inlined_call_operand.vmem [shape: f32[16,6], index: 0, kind: input, shape index: {}]
  %s1 = inlined_call_operand.vmem [shape: f32[6,32], index: 1, kind: input, shape index: {}]
  %s2 = inlined_call_operand.vmem [shape: f32[6,32], index: 2, kind: input, shape index: {}]
  %s3 = inlined_call_operand.vmem [shape: f32[6,32], index: 3, kind: input, shape index: {}]
  %s4 = inlined_call_operand.vmem [shape: f32[1,32], index: 4, kind: input, shape index: {}]
  %s5 = inlined_call_operand.hbm [shape: f32[16,32], index: 5, kind: output, shape index: {}]
  %s6 = sld [smem:[#allocation0]]
  $region53: #{tpu_custom_call.1} parent=0
    _
  %s8 = ssub.s32 1, %s6
  %s9 = scalar_select 0, %s8, %s6
  $region1: #{tpu_custom_call.1} parent=0
    #allocation2 [shape = 'u8[8192]{0}', space=vmem, size = 0x2000, scoped, tag = 'output window, operand 0']
    #allocation3 [shape = 's32[2]{0}', space=sflag, size = 0x8, scoped, tag = 'scoped memory for tpu_custom_call.1']
    %10 = vsyncpa [#allocation3], 0
    %s11 = scalar_lea.sflag [#allocation3], 1
    %12 = vsyncpa %s11, 0
    loop: start=0, step=1, limit=4
    $region2: #{tpu_custom_call.1} parent=1 // loop_pre_header
      _
    $region3: #{tpu_custom_call.1} parent=1 // loop_header
      %s14 = sphi 0, %s18
      %p15 = scmp.ge.s32.totalorder %s14, 4
      %s24 = sphi 0, %s26
      %s27 = sphi 0, %s24
      %s28 = sphi 0, %s27
      %s44 = sphi 0, %s28
      %s48 = sphi 0, %s48
      %s50 = sphi 0, %s48
      %s51 = sphi 0, %s50
      %s65 = sphi 0, %s51
      %s69 = sphi 0, %s69
      %s71 = sphi 0, %s69
      %s72 = sphi 0, %s71
      %s86 = sphi 0, %s72
      %s90 = sphi 0, %s90
      %s92 = sphi 0, %s90
      %s93 = sphi 0, %s92
      %s107 = sphi 0, %s93
      %s111 = sphi 0, %s111
      %s113 = sphi 0, %s111
      %s114 = sphi 0, %s113
      %s128 = sphi 0, %s114
      %s134 = sphi 0, %s136
      %s137 = sphi 0, %s134
      %s138 = sphi 0, %s137
      %s154 = sphi 0, %s138
    $region4: #{tpu_custom_call.1} parent=1 // loop_header_branch
      %17 = sbr.rel (%p15) target = $region8
    $region5: #{tpu_custom_call.1} parent=1 // loop_body
      %s19 = ssub.s32 %s14, 1
      %s20 = ssub.s32 %s14, 2
      %s21 = sadd.s32 %s14, 1
      %s22 = ssub.s32 %s14, %s21
      %p23 = scmp.eq.s32.totalorder %s22, 0
      %s25 = sadd.s32 %s24, 1
      %s26 = scalar_select %p23, %s24, %s25
      %p29 = pneg %p23
      %p30 = scmp.eq.s32.totalorder %s14, 1
      %p31 = por %p29, %p30
      %p32 = scmp.ne.s32.totalorder %s24, %s27
      %p33 = scmp.eq.s32.totalorder %s14, 0
      %p34 = por %p32, %p33
      %p35 = scmp.ne.s32.totalorder %s24, %s27
      %p36 = scmp.eq.s32.totalorder %s19, 1
      %p37 = por %p35, %p36
      %p38 = scmp.ne.s32.totalorder %s27, %s28
      %p39 = scmp.eq.s32.totalorder %s19, 0
      %p40 = por %p38, %p39
      %p41 = scmp.ne.s32.totalorder %s27, %s28
      %p42 = scmp.eq.s32.totalorder %s20, 1
      %p43 = por %p41, %p42
      %p45 = scmp.ne.s32.totalorder %s28, %s44
      %p46 = scmp.eq.s32.totalorder %s20, 0
      %p47 = por %p45, %p46
      %s49 = sadd.s32 %s48, 1
      %p52 = scmp.eq.s32.totalorder %s14, 1
      %p53 = scmp.ne.s32.totalorder %s48, %s50
      %p54 = scmp.eq.s32.totalorder %s14, 0
      %p55 = por %p53, %p54
      %p56 = scmp.ne.s32.totalorder %s48, %s50
      %p57 = scmp.eq.s32.totalorder %s19, 1
      %p58 = por %p56, %p57
      %p59 = scmp.ne.s32.totalorder %s50, %s51
      %p60 = scmp.eq.s32.totalorder %s19, 0
      %p61 = por %p59, %p60
      %p62 = scmp.ne.s32.totalorder %s50, %s51
      %p63 = scmp.eq.s32.totalorder %s20, 1
      %p64 = por %p62, %p63
      %p66 = scmp.ne.s32.totalorder %s51, %s65
      %p67 = scmp.eq.s32.totalorder %s20, 0
      %p68 = por %p66, %p67
      %s70 = sadd.s32 %s69, 1
      %p73 = scmp.eq.s32.totalorder %s14, 1
      %p74 = scmp.ne.s32.totalorder %s69, %s71
      %p75 = scmp.eq.s32.totalorder %s14, 0
      %p76 = por %p74, %p75
      %p77 = scmp.ne.s32.totalorder %s69, %s71
      %p78 = scmp.eq.s32.totalorder %s19, 1
      %p79 = por %p77, %p78
      %p80 = scmp.ne.s32.totalorder %s71, %s72
      %p81 = scmp.eq.s32.totalorder %s19, 0
      %p82 = por %p80, %p81
      %p83 = scmp.ne.s32.totalorder %s71, %s72
      %p84 = scmp.eq.s32.totalorder %s20, 1
      %p85 = por %p83, %p84
      %p87 = scmp.ne.s32.totalorder %s72, %s86
      %p88 = scmp.eq.s32.totalorder %s20, 0
      %p89 = por %p87, %p88
      %s91 = sadd.s32 %s90, 1
      %p94 = scmp.eq.s32.totalorder %s14, 1
      %p95 = scmp.ne.s32.totalorder %s90, %s92
      %p96 = scmp.eq.s32.totalorder %s14, 0
      %p97 = por %p95, %p96
      %p98 = scmp.ne.s32.totalorder %s90, %s92
      %p99 = scmp.eq.s32.totalorder %s19, 1
      %p100 = por %p98, %p99
      %p101 = scmp.ne.s32.totalorder %s92, %s93
      %p102 = scmp.eq.s32.totalorder %s19, 0
      %p103 = por %p101, %p102
      %p104 = scmp.ne.s32.totalorder %s92, %s93
      %p105 = scmp.eq.s32.totalorder %s20, 1
      %p106 = por %p104, %p105
      %p108 = scmp.ne.s32.totalorder %s93, %s107
      %p109 = scmp.eq.s32.totalorder %s20, 0
      %p110 = por %p108, %p109
      %s112 = sadd.s32 %s111, 1
      %p115 = scmp.eq.s32.totalorder %s14, 1
      %p116 = scmp.ne.s32.totalorder %s111, %s113
      %p117 = scmp.eq.s32.totalorder %s14, 0
      %p118 = por %p116, %p117
      %p119 = scmp.ne.s32.totalorder %s111, %s113
      %p120 = scmp.eq.s32.totalorder %s19, 1
      %p121 = por %p119, %p120
      %p122 = scmp.ne.s32.totalorder %s113, %s114
      %p123 = scmp.eq.s32.totalorder %s19, 0
      %p124 = por %p122, %p123
      %p125 = scmp.ne.s32.totalorder %s113, %s114
      %p126 = scmp.eq.s32.totalorder %s20, 1
      %p127 = por %p125, %p126
      %p129 = scmp.ne.s32.totalorder %s114, %s128
      %p130 = scmp.eq.s32.totalorder %s20, 0
      %p131 = por %p129, %p130
      %s132 = ssub.s32 %s14, %s21
      %p133 = scmp.eq.s32.totalorder %s132, 0
      %s135 = sadd.s32 %s134, 1
      %s136 = scalar_select %p133, %s134, %s135
      %p139 = pneg %p133
      %p140 = scmp.eq.s32.totalorder %s14, 1
      %p141 = por %p139, %p140
      %p142 = scmp.ne.s32.totalorder %s134, %s137
      %p143 = scmp.eq.s32.totalorder %s14, 0
      %p144 = por %p142, %p143
      %p145 = scmp.ne.s32.totalorder %s134, %s137
      %p146 = scmp.eq.s32.totalorder %s19, 1
      %p147 = por %p145, %p146
      %p148 = scmp.ne.s32.totalorder %s137, %s138
      %p149 = scmp.eq.s32.totalorder %s19, 0
      %p150 = por %p148, %p149
      %p151 = scmp.ne.s32.totalorder %s137, %s138
      %p152 = scmp.eq.s32.totalorder %s20, 1
      %p153 = por %p151, %p152
      %p155 = scmp.ne.s32.totalorder %s138, %s154
      %p156 = scmp.eq.s32.totalorder %s20, 0
      %p157 = por %p155, %p156
      %p158 = scmp.le.s32.totalorder 1, %s14
      %p159 = scmp.lt.s32.totalorder %s14, 3
      %p160 = pnand %p158, %p159
      %p161 = pneg %p160
      // Predicated region
      $region9: #{tpu_custom_call.1} parent=5 // pred_check
        _
      $region10: #{tpu_custom_call.1} parent=5 // pred_check_branch
        %163 = sbr.rel (%p160) target = $region12
      $region11: #{tpu_custom_call.1} parent=5 // pred_region
        %s164 = ssub.s32 %s14, 1
        // Predicated region
        $region13: #{tpu_custom_call.1} parent=11 // pred_check
          %p165 = pneg %p61
        $region14: #{tpu_custom_call.1} parent=11 // pred_check_branch
          %167 = sbr.rel (%p165) target = $region16
        $region15: #{tpu_custom_call.1} parent=11 // pred_region
          _
        $region16: #{tpu_custom_call.1} parent=11 // pred_fallthru
          _
        // Predicated region
        $region17: #{tpu_custom_call.1} parent=11 // pred_check
          %p168 = pneg %p82
        $region18: #{tpu_custom_call.1} parent=11 // pred_check_branch
          %170 = sbr.rel (%p168) target = $region20
        $region19: #{tpu_custom_call.1} parent=11 // pred_region
          _
        $region20: #{tpu_custom_call.1} parent=11 // pred_fallthru
          _
        // Predicated region
        $region21: #{tpu_custom_call.1} parent=11 // pred_check
          %p171 = pneg %p103
        $region22: #{tpu_custom_call.1} parent=11 // pred_check_branch
          %173 = sbr.rel (%p171) target = $region24
        $region23: #{tpu_custom_call.1} parent=11 // pred_region
          _
        $region24: #{tpu_custom_call.1} parent=11 // pred_fallthru
          _
        // Predicated region
        $region25: #{tpu_custom_call.1} parent=11 // pred_check
          %p174 = pneg %p124
        $region26: #{tpu_custom_call.1} parent=11 // pred_check_branch
          %176 = sbr.rel (%p174) target = $region28
        $region27: #{tpu_custom_call.1} parent=11 // pred_region
          _
        $region28: #{tpu_custom_call.1} parent=11 // pred_fallthru
          _
      $region12: #{tpu_custom_call.1} parent=5 // pred_fallthru
        _
      %p177 = scmp.lt.s32.totalorder %s14, 2
      // Predicated region
      $region29: #{tpu_custom_call.1} parent=5 // pred_check
        %p178 = pneg %p177
      $region30: #{tpu_custom_call.1} parent=5 // pred_check_branch
        %180 = sbr.rel (%p178) target = $region32
      $region31: #{tpu_custom_call.1} parent=5 // pred_region
        // Predicated region
        $region33: #{tpu_custom_call.1} parent=31 // pred_check
          %p181 = pneg %p34
        $region34: #{tpu_custom_call.1} parent=31 // pred_check_branch
          %183 = sbr.rel (%p181) target = $region36
        $region35: #{tpu_custom_call.1} parent=31 // pred_region
          %p184 = scmp.lt.s32.totalorder %s14, 1
          %s185 = scalar_select %p184, %s14, 1
          %s186 = smul.addr %s185, 8
          %s187 = scalar_lea.vmem %s0, %s186
        $region36: #{tpu_custom_call.1} parent=31 // pred_fallthru
          _
      $region32: #{tpu_custom_call.1} parent=5 // pred_fallthru
        _
      %p188 = scmp.le.s32.totalorder 1, %s14
      %p189 = scmp.lt.s32.totalorder %s14, 3
      %p190 = pnand %p188, %p189
      %p191 = pneg %p190
      // Predicated region
      $region37: #{tpu_custom_call.1} parent=5 // pred_check
        _
      $region38: #{tpu_custom_call.1} parent=5 // pred_check_branch
        %193 = sbr.rel (%p190) target = $region40
      $region39: #{tpu_custom_call.1} parent=5 // pred_region
        %s194 = ssub.s32 %s14, 1
        %p195 = scmp.lt.s32.totalorder %s19, 1
        %s196 = scalar_select %p195, %s19, 1
        %s197 = smul.addr %s196, 8
        %s198 = scalar_lea.vmem %s0, %s197
        %p199 = pneg %p40
        %p200 = pneg %p37
        %p201 = pneg %p61
        %p202 = pneg %p58
        %p203 = pneg %p82
        %p204 = pneg %p79
        %p205 = pneg %p103
        %p206 = pneg %p100
        %p207 = pneg %p124
        %p208 = pneg %p121
        %p209 = pneg %p150
        %p210 = pneg %p147
        %s211 = sand.u32 %s137, 1
        %s212 = scalar_lea.sflag [#allocation3], %s211
        %s213 = sand.u32 %s137, 1
        %s214 = smul.addr %s213, 8
        %s215 = scalar_lea.vmem [#allocation2], %s214
        %p216 = scmp.lt.s32.totalorder %s19, 1
        %s217 = scalar_select %p216, %s19, 1
        %s218 = smul.addr %s217, 8
        %s219 = scalar_lea.vmem %s0, %s218
        %v220 = vld [vmem:[%s219] sm:$0xff]
        %v221 = vld [vmem:[%s1] sm:$0x3f]
        %v222 = vand.u32 2147483647, %v220
        %vm223 = vcmp.le.f32.partialorder %v222, 0.7853982
        %vm224 = vcmp.lt.s32.totalorder %v220, 0
        %v225 = vand.u32 %v220, 2139095040
        %v226 = vshrl.u32 %v225, 23
        %v227 = vsub.s32 %v226, 127
        %v228 = vand.u32 2147483647, %v220
        %v229 = vand.u32 %v228, 8388607
        %v230 = vor.u32 %v229, 8388608
        %v231 = vsub.s32 0, %v230
        %v232 = vadd.s32 %v227, 1
        %vm233 = vcmp.gt.s32.totalorder %v232, 0
        %v234 = vsel %vm233, %v232, 0
        %v235 = vshrl.u32 %v234, 5
        %v236 = vand.u32 %v234, 31
        %v237 = vsub.s32 32, %v236
        %v238 = vshrl.u32 683565275, %v237
        %v239 = vshll.u32 683565275, %v236
        %v240 = vshrl.u32 2475754826, %v237
        %v241 = vor.u32 %v239, %v240
        %v242 = vshll.u32 2475754826, %v236
        %v243 = vshrl.u32 2131351028, %v237
        %v244 = vor.u32 %v242, %v243
        %v245 = vshll.u32 2131351028, %v236
        %v246 = vshrl.u32 2102212464, %v237
        %v247 = vor.u32 %v245, %v246
        %v248 = vshll.u32 2102212464, %v236
        %v249 = vshrl.u32 920167782, %v237
        %v250 = vor.u32 %v248, %v249
        %v251 = vshll.u32 920167782, %v236
        %v252 = vshrl.u32 1326507024, %v237
        %v253 = vor.u32 %v251, %v252
        %vm254 = vcmp.lt.s32.totalorder %v235, 1
        %vm255 = vcmp.lt.s32.totalorder %v235, 2
        %vm256 = vcmp.lt.s32.totalorder %v235, 3
        %vm257 = vcmp.lt.s32.totalorder %v235, 4
        %v258 = vsel %vm254, %v238, %v241
        %v259 = vsel %vm257, %v247, 2102212464
        %v260 = vsel %vm256, %v244, %v259
        %v261 = vsel %vm255, %v258, %v260
        %v262 = vsel %vm254, %v241, %v244
        %v263 = vsel %vm257, %v250, 920167782
        %v264 = vsel %vm256, %v247, %v263
        %v265 = vsel %vm255, %v262, %v264
        %v266 = vsel %vm254, %v244, %v247
        %v267 = vsel %vm257, %v253, 1326507024
        %v268 = vsel %vm256, %v250, %v267
        %v269 = vsel %vm255, %v266, %v268
        %v270 = vshll.u32 %v230, 8
        %v271 = vmul.u32.u64.compose %v270, %v269
        %v272 = vextract.low.u32 %v271
        %v273 = vextract.high.u32 %v271
        %v274 = vmul.u32.u64.compose %v270, %v265
        %v275 = vextract.low.u32 %v274
        %v276 = vextract.high.u32 %v274
        %v277 = vmul.u32 %v270, %v261
        %v278 = vadd.s32 %v273, %v275
        %vm279 = vc.u32 %v273, %v275
        %v280 = vadd.s32 %v276, 1
        %v281 = vsel %vm279, %v280, %v276
        %v282 = vadd.s32 %v277, %v281
        %v283 = vadd.s32 %v282, 536870912
        %v284 = vshrl.u32 %v283, 30
        %v285 = vshll.u32 %v284, 30
        %v286 = vsub.s32 %v282, %v285
        %vm287 = vcmp.lt.s32.totalorder %v286, 0
        %v288 = vsub.s32 0, %v286
        %v289 = vsel %vm287, %v288, %v286
        %v290 = vclz %v289
        %v291 = vsub.s32 %v290, 2
        %vm292 = vcmp.gt.s32.totalorder 0, %v291
        %v293 = vsel %vm292, 0, %v291
        %v294 = vsub.s32 32, %v293
        %v295 = vshll.u32 %v286, %v293
        %v296 = vshrl.u32 %v278, %v294
        %v297 = vor.u32 %v295, %v296
        %v298 = vsub.s32 4294967266, %v293
        %v299 = vadd.s32 %v298, 127
        %v300 = vshll.u32 %v299, 23
        %v301 = vor.u32 4788187, %v300
        %v302 = vand.u32 2147483647, %v301
        %v304 = vcvt.s32.f32 %v297
        %v305 = vmul.f32 %v304, %v302
        %v306 = vxor.u32 %v305, 2147483648
        %v307 = vsel %vm224, %v306, %v305
        %v308 = vsub.s32 4, %v284
        %v309 = vsel %vm224, %v308, %v284
        %v310 = vsel %vm223, %v220, %v307
        %v311 = vsel %vm223, 0, %v309
        %v312 = vcosq.f32.pop %v310
        %v313 = vsinq.f32.pop %v310
        %vm314 = vweird.f32 %v220
        %v315 = vadd.s32 %v311, 3
        %v316 = vand.u32 %v315, 3
        %vm317 = vcmp.lt.s32.totalorder %v316, 2
        %vm318 = vcmp.eq.s32.totalorder %v316, 0
        %v319 = vxor.u32 %v313, 2147483648
        %v320 = vsel %vm318, %v312, %v319
        %vm321 = vcmp.eq.s32.totalorder %v316, 2
        %v322 = vxor.u32 %v312, 2147483648
        %v323 = vsel %vm321, %v322, %v313
        %v324 = vsel %vm317, %v320, %v323
        %v325 = vsel %vm314, nan, %v324
        %v326 = vld [vmem:[%s2] sm:$0x3f]
        %vm327 = vcmask 48128
        %v329 = vsel %vm327, %v325, 0
        %vm331 = vcmask 1045504
        %v333 = vsel %vm331, %v326, 0
        %335 = vmatprep.subr.mxu0 0.0
        %336 = vmatpush1.msra.mxu0 %v333
        %337 = vmatprep.subr.mxu0 0.0
        %338 = vmatpush1.msra.mxu0 0.0
        %339 = vmatprep.subr.mxu0 0.0
        %340 = vmatpush1.msra.mxu0 0.0
        %341 = vmatprep.subr.mxu0 0.0
        %342 = vmatpush1.msra.mxu0 0.0
        %343 = vmatprep.subr.mxu0 0.0
        %344 = vmatpush1.msra.mxu0 0.0
        %345 = vmatprep.subr.mxu0 0.0
        %346 = vmatpush1.msra.mxu0 0.0
        %347 = vmatprep.subr.mxu0 0.0
        %348 = vmatpush1.msra.mxu0 0.0
        %349 = vmatprep.subr.mxu0 0.0
        %350 = vmatpush1.msra.mxu0 0.0
        %351 = vmatprep.subr.mxu0 0.0
        %352 = vmatpush1.msra.mxu0 0.0
        %353 = vmatprep.subr.mxu0 0.0
        %354 = vmatpush1.msra.mxu0 0.0
        %355 = vmatprep.subr.mxu0 0.0
        %356 = vmatpush1.msra.mxu0 0.0
        %357 = vmatprep.subr.mxu0 0.0
        %358 = vmatpush1.msra.mxu0 0.0
        %359 = vmatprep.subr.mxu0 0.0
        %360 = vmatpush1.msra.mxu0 0.0
        %361 = vmatprep.subr.mxu0 0.0
        %362 = vmatpush1.msra.mxu0 0.0
        %363 = vmatprep.subr.mxu0 0.0
        %364 = vmatpush1.msra.mxu0 0.0
        %365 = vmatprep.subr.mxu0 0.0
        %366 = vmatpush1.msra.mxu0 0.0
        %367 = vmatprep.subr.mxu0 0.0
        %368 = vmatpush1.msra.mxu0 0.0
        %369 = vmatprep.subr.mxu0 0.0
        %370 = vmatpush1.msra.mxu0 0.0
        %371 = vmatprep.subr.mxu0 0.0
        %372 = vmatpush1.msra.mxu0 0.0
        %373 = vmatprep.subr.mxu0 0.0
        %374 = vmatpush1.msra.mxu0 0.0
        %375 = vmatprep.subr.mxu0 0.0
        %376 = vmatpush1.msra.mxu0 0.0
        %377 = vmatprep.subr.mxu0 0.0
        %378 = vmatpush1.msra.mxu0 0.0
        %379 = vmatprep.subr.mxu0 0.0
        %380 = vmatpush1.msra.mxu0 0.0
        %381 = vmatprep.subr.mxu0 0.0
        %382 = vmatpush1.msra.mxu0 0.0
        %383 = vmatprep.subr.mxu0 0.0
        %384 = vmatpush1.msra.mxu0 0.0
        %385 = vmatprep.subr.mxu0 0.0
        %386 = vmatpush1.msra.mxu0 0.0
        %387 = vmatprep.subr.mxu0 0.0
        %388 = vmatpush1.msra.mxu0 0.0
        %389 = vmatprep.subr.mxu0 0.0
        %390 = vmatpush1.msra.mxu0 0.0
        %391 = vmatprep.subr.mxu0 0.0
        %392 = vmatpush1.msra.mxu0 0.0
        %393 = vmatprep.subr.mxu0 0.0
        %394 = vmatpush1.msra.mxu0 0.0
        %395 = vmatprep.subr.mxu0 0.0
        %396 = vmatpush1.msra.mxu0 0.0
        %397 = vmatprep.subr.mxu0 0.0
        %398 = vmatpush1.msra.mxu0 0.0
        %399 = vmatprep.mubr.f32.mxu0 0.0
        %400 = vmatmul.mubr.f32.gmra.mrb[0].mxu0 %v329
        %v401 = vpop.f32.mrb[0].mxu0
        %v402 = vadd.f32 0.0, %v401
        %v403 = vpop.f32.mrb[0].mxu0
        %404 = vdwg.mxu0
        %v406 = vsel %vm327, %v220, 0
        %v409 = vsel %vm331, %v221, 0
        %411 = vmatprep.subr.mxu0 0.0
        %412 = vmatpush1.msra.mxu0 %v409
        %413 = vmatprep.subr.mxu0 0.0
        %414 = vmatpush1.msra.mxu0 0.0
        %415 = vmatprep.subr.mxu0 0.0
        %416 = vmatpush1.msra.mxu0 0.0
        %417 = vmatprep.subr.mxu0 0.0
        %418 = vmatpush1.msra.mxu0 0.0
        %419 = vmatprep.subr.mxu0 0.0
        %420 = vmatpush1.msra.mxu0 0.0
        %421 = vmatprep.subr.mxu0 0.0
        %422 = vmatpush1.msra.mxu0 0.0
        %423 = vmatprep.subr.mxu0 0.0
        %424 = vmatpush1.msra.mxu0 0.0
        %425 = vmatprep.subr.mxu0 0.0
        %426 = vmatpush1.msra.mxu0 0.0
        %427 = vmatprep.subr.mxu0 0.0
        %428 = vmatpush1.msra.mxu0 0.0
        %429 = vmatprep.subr.mxu0 0.0
        %430 = vmatpush1.msra.mxu0 0.0
        %431 = vmatprep.subr.mxu0 0.0
        %432 = vmatpush1.msra.mxu0 0.0
        %433 = vmatprep.subr.mxu0 0.0
        %434 = vmatpush1.msra.mxu0 0.0
        %435 = vmatprep.subr.mxu0 0.0
        %436 = vmatpush1.msra.mxu0 0.0
        %437 = vmatprep.subr.mxu0 0.0
        %438 = vmatpush1.msra.mxu0 0.0
        %439 = vmatprep.subr.mxu0 0.0
        %440 = vmatpush1.msra.mxu0 0.0
        %441 = vmatprep.subr.mxu0 0.0
        %442 = vmatpush1.msra.mxu0 0.0
        %443 = vmatprep.subr.mxu0 0.0
        %444 = vmatpush1.msra.mxu0 0.0
        %445 = vmatprep.subr.mxu0 0.0
        %446 = vmatpush1.msra.mxu0 0.0
        %447 = vmatprep.subr.mxu0 0.0
        %448 = vmatpush1.msra.mxu0 0.0
        %449 = vmatprep.subr.mxu0 0.0
        %450 = vmatpush1.msra.mxu0 0.0
        %451 = vmatprep.subr.mxu0 0.0
        %452 = vmatpush1.msra.mxu0 0.0
        %453 = vmatprep.subr.mxu0 0.0
        %454 = vmatpush1.msra.mxu0 0.0
        %455 = vmatprep.subr.mxu0 0.0
        %456 = vmatpush1.msra.mxu0 0.0
        %457 = vmatprep.subr.mxu0 0.0
        %458 = vmatpush1.msra.mxu0 0.0
        %459 = vmatprep.subr.mxu0 0.0
        %460 = vmatpush1.msra.mxu0 0.0
        %461 = vmatprep.subr.mxu0 0.0
        %462 = vmatpush1.msra.mxu0 0.0
        %463 = vmatprep.subr.mxu0 0.0
        %464 = vmatpush1.msra.mxu0 0.0
        %465 = vmatprep.subr.mxu0 0.0
        %466 = vmatpush1.msra.mxu0 0.0
        %467 = vmatprep.subr.mxu0 0.0
        %468 = vmatpush1.msra.mxu0 0.0
        %469 = vmatprep.subr.mxu0 0.0
        %470 = vmatpush1.msra.mxu0 0.0
        %471 = vmatprep.subr.mxu0 0.0
        %472 = vmatpush1.msra.mxu0 0.0
        %473 = vmatprep.subr.mxu0 0.0
        %474 = vmatpush1.msra.mxu0 0.0
        %475 = vmatprep.mubr.f32.mxu0 0.0
        %476 = vmatmul.mubr.f32.gmra.mrb[0].mxu0 %v406
        %v477 = vpop.f32.mrb[0].mxu0
        %v478 = vadd.f32 %v402, %v477
        %v479 = vpop.f32.mrb[0].mxu0
        %480 = vdwg.mxu0
        %v481 = vand.u32 2147483647, %v220
        %vm482 = vcmp.le.f32.partialorder %v481, 0.7853982
        %vm483 = vcmp.lt.s32.totalorder %v220, 0
        %v484 = vand.u32 %v220, 2139095040
        %v485 = vshrl.u32 %v484, 23
        %v486 = vsub.s32 %v485, 127
        %v487 = vand.u32 2147483647, %v220
        %v488 = vand.u32 %v487, 8388607
        %v489 = vor.u32 %v488, 8388608
        %v490 = vsub.s32 0, %v489
        %v491 = vadd.s32 %v486, 1
        %vm492 = vcmp.gt.s32.totalorder %v491, 0
        %v493 = vsel %vm492, %v491, 0
        %v494 = vshrl.u32 %v493, 5
        %v495 = vand.u32 %v493, 31
        %v496 = vsub.s32 32, %v495
        %v497 = vshrl.u32 683565275, %v496
        %v498 = vshll.u32 683565275, %v495
        %v499 = vshrl.u32 2475754826, %v496
        %v500 = vor.u32 %v498, %v499
        %v501 = vshll.u32 2475754826, %v495
        %v502 = vshrl.u32 2131351028, %v496
        %v503 = vor.u32 %v501, %v502
        %v504 = vshll.u32 2131351028, %v495
        %v505 = vshrl.u32 2102212464, %v496
        %v506 = vor.u32 %v504, %v505
        %v507 = vshll.u32 2102212464, %v495
        %v508 = vshrl.u32 920167782, %v496
        %v509 = vor.u32 %v507, %v508
        %v510 = vshll.u32 920167782, %v495
        %v511 = vshrl.u32 1326507024, %v496
        %v512 = vor.u32 %v510, %v511
        %vm513 = vcmp.lt.s32.totalorder %v494, 1
        %vm514 = vcmp.lt.s32.totalorder %v494, 2
        %vm515 = vcmp.lt.s32.totalorder %v494, 3
        %vm516 = vcmp.lt.s32.totalorder %v494, 4
        %v517 = vsel %vm513, %v497, %v500
        %v518 = vsel %vm516, %v506, 2102212464
        %v519 = vsel %vm515, %v503, %v518
        %v520 = vsel %vm514, %v517, %v519
        %v521 = vsel %vm513, %v500, %v503
        %v522 = vsel %vm516, %v509, 920167782
        %v523 = vsel %vm515, %v506, %v522
        %v524 = vsel %vm514, %v521, %v523
        %v525 = vsel %vm513, %v503, %v506
        %v526 = vsel %vm516, %v512, 1326507024
        %v527 = vsel %vm515, %v509, %v526
        %v528 = vsel %vm514, %v525, %v527
        %v529 = vshll.u32 %v489, 8
        %v530 = vmul.u32.u64.compose %v529, %v528
        %v531 = vextract.low.u32 %v530
        %v532 = vextract.high.u32 %v530
        %v533 = vmul.u32.u64.compose %v529, %v524
        %v534 = vextract.low.u32 %v533
        %v535 = vextract.high.u32 %v533
        %v536 = vmul.u32 %v529, %v520
        %v537 = vadd.s32 %v532, %v534
        %vm538 = vc.u32 %v532, %v534
        %v539 = vadd.s32 %v535, 1
        %v540 = vsel %vm538, %v539, %v535
        %v541 = vadd.s32 %v536, %v540
        %v542 = vadd.s32 %v541, 536870912
        %v543 = vshrl.u32 %v542, 30
        %v544 = vshll.u32 %v543, 30
        %v545 = vsub.s32 %v541, %v544
        %vm546 = vcmp.lt.s32.totalorder %v545, 0
        %v547 = vsub.s32 0, %v545
        %v548 = vsel %vm546, %v547, %v545
        %v549 = vclz %v548
        %v550 = vsub.s32 %v549, 2
        %vm551 = vcmp.gt.s32.totalorder 0, %v550
        %v552 = vsel %vm551, 0, %v550
        %v553 = vsub.s32 32, %v552
        %v554 = vshll.u32 %v545, %v552
        %v555 = vshrl.u32 %v537, %v553
        %v556 = vor.u32 %v554, %v555
        %v557 = vsub.s32 4294967266, %v552
        %v558 = vadd.s32 %v557, 127
        %v559 = vshll.u32 %v558, 23
        %v560 = vor.u32 4788187, %v559
        %v561 = vand.u32 2147483647, %v560
        %v563 = vcvt.s32.f32 %v556
        %v564 = vmul.f32 %v563, %v561
        %v565 = vxor.u32 %v564, 2147483648
        %v566 = vsel %vm483, %v565, %v564
        %v567 = vsub.s32 4, %v543
        %v568 = vsel %vm483, %v567, %v543
        %v569 = vsel %vm482, %v220, %v566
        %v570 = vsel %vm482, 0, %v568
        %v571 = vcosq.f32.pop %v569
        %v572 = vsinq.f32.pop %v569
        %vm573 = vweird.f32 %v220
        %v574 = vand.u32 %v570, 3
        %vm575 = vcmp.lt.s32.totalorder %v574, 2
        %vm576 = vcmp.eq.s32.totalorder %v574, 0
        %v577 = vxor.u32 %v572, 2147483648
        %v578 = vsel %vm576, %v571, %v577
        %vm579 = vcmp.eq.s32.totalorder %v574, 2
        %v580 = vxor.u32 %v571, 2147483648
        %v581 = vsel %vm579, %v580, %v572
        %v582 = vsel %vm575, %v578, %v581
        %v583 = vsel %vm573, nan, %v582
        %v584 = vld [vmem:[%s3] sm:$0x3f]
        %v586 = vsel %vm327, %v583, 0
        %v589 = vsel %vm331, %v584, 0
        %591 = vmatprep.subr.mxu0 0.0
        %592 = vmatpush1.msra.mxu0 %v589
        %593 = vmatprep.subr.mxu0 0.0
        %594 = vmatpush1.msra.mxu0 0.0
        %595 = vmatprep.subr.mxu0 0.0
        %596 = vmatpush1.msra.mxu0 0.0
        %597 = vmatprep.subr.mxu0 0.0
        %598 = vmatpush1.msra.mxu0 0.0
        %599 = vmatprep.subr.mxu0 0.0
        %600 = vmatpush1.msra.mxu0 0.0
        %601 = vmatprep.subr.mxu0 0.0
        %602 = vmatpush1.msra.mxu0 0.0
        %603 = vmatprep.subr.mxu0 0.0
        %604 = vmatpush1.msra.mxu0 0.0
        %605 = vmatprep.subr.mxu0 0.0
        %606 = vmatpush1.msra.mxu0 0.0
        %607 = vmatprep.subr.mxu0 0.0
        %608 = vmatpush1.msra.mxu0 0.0
        %609 = vmatprep.subr.mxu0 0.0
        %610 = vmatpush1.msra.mxu0 0.0
        %611 = vmatprep.subr.mxu0 0.0
        %612 = vmatpush1.msra.mxu0 0.0
        %613 = vmatprep.subr.mxu0 0.0
        %614 = vmatpush1.msra.mxu0 0.0
        %615 = vmatprep.subr.mxu0 0.0
        %616 = vmatpush1.msra.mxu0 0.0
        %617 = vmatprep.subr.mxu0 0.0
        %618 = vmatpush1.msra.mxu0 0.0
        %619 = vmatprep.subr.mxu0 0.0
        %620 = vmatpush1.msra.mxu0 0.0
        %621 = vmatprep.subr.mxu0 0.0
        %622 = vmatpush1.msra.mxu0 0.0
        %623 = vmatprep.subr.mxu0 0.0
        %624 = vmatpush1.msra.mxu0 0.0
        %625 = vmatprep.subr.mxu0 0.0
        %626 = vmatpush1.msra.mxu0 0.0
        %627 = vmatprep.subr.mxu0 0.0
        %628 = vmatpush1.msra.mxu0 0.0
        %629 = vmatprep.subr.mxu0 0.0
        %630 = vmatpush1.msra.mxu0 0.0
        %631 = vmatprep.subr.mxu0 0.0
        %632 = vmatpush1.msra.mxu0 0.0
        %633 = vmatprep.subr.mxu0 0.0
        %634 = vmatpush1.msra.mxu0 0.0
        %635 = vmatprep.subr.mxu0 0.0
        %636 = vmatpush1.msra.mxu0 0.0
        %637 = vmatprep.subr.mxu0 0.0
        %638 = vmatpush1.msra.mxu0 0.0
        %639 = vmatprep.subr.mxu0 0.0
        %640 = vmatpush1.msra.mxu0 0.0
        %641 = vmatprep.subr.mxu0 0.0
        %642 = vmatpush1.msra.mxu0 0.0
        %643 = vmatprep.subr.mxu0 0.0
        %644 = vmatpush1.msra.mxu0 0.0
        %645 = vmatprep.subr.mxu0 0.0
        %646 = vmatpush1.msra.mxu0 0.0
        %647 = vmatprep.subr.mxu0 0.0
        %648 = vmatpush1.msra.mxu0 0.0
        %649 = vmatprep.subr.mxu0 0.0
        %650 = vmatpush1.msra.mxu0 0.0
        %651 = vmatprep.subr.mxu0 0.0
        %652 = vmatpush1.msra.mxu0 0.0
        %653 = vmatprep.subr.mxu0 0.0
        %654 = vmatpush1.msra.mxu0 0.0
        %655 = vmatprep.mubr.f32.mxu0 0.0
        %656 = vmatmul.mubr.f32.gmra.mrb[0].mxu0 %v586
        %v657 = vpop.f32.mrb[0].mxu0
        %v658 = vadd.f32 0.0, %v657
        %v659 = vpop.f32.mrb[0].mxu0
        %660 = vdwg.mxu0
        %v661 = vadd.f32 %v478, %v658
        %v662 = vld [vmem:[%s4] sm:$0x1]
        %v664 = vlaneseq
        %v665 = vshrl.u32 %v664, 7
        %v666 = vsub.s32 0, %v665
        %v667 = vrot.slane %v662, %v666
        %v669 = vadd.f32 %v661, %v667
        %vm670 = vcmask 261120
        %671 = vst.msk [vmem:[%s215] sm:$0xff] %vm670, %v669
        %s672 = sand.u32 %s137, 1
        %s673 = scalar_lea.sflag [#allocation3], %s672
        %s674 = sand.u32 %s137, 1
        %s675 = smul.addr %s674, 8
        %s676 = scalar_lea.vmem [#allocation2], %s675
        // Predicated region
        $region41: #{tpu_custom_call.1} parent=39 // pred_check
          %p677 = pneg %p147
        $region42: #{tpu_custom_call.1} parent=39 // pred_check_branch
          %679 = sbr.rel (%p677) target = $region44
        $region43: #{tpu_custom_call.1} parent=39 // pred_region
          %s681 = ssub.s32 128, 128
          %682 = vsyncadd %s673, %s681
          %s683 = smul.addr %s19, 128
          %s684 = scalar_lea.hbm %s5, %s683
          %s686 = sshll.u32 %s676, 4
          %s687 = int_to_ptr.vmem [resolvable:$true] %s686
          %689 = dma.vmem_to_hbm [thread:$0]  %s687, 128, %s684, %s673
        $region44: #{tpu_custom_call.1} parent=39 // pred_fallthru
          _
      $region40: #{tpu_custom_call.1} parent=5 // pred_fallthru
        _
      %p690 = scmp.le.s32.totalorder 2, %s14
      // Predicated region
      $region45: #{tpu_custom_call.1} parent=5 // pred_check
        %p691 = pneg %p690
      $region46: #{tpu_custom_call.1} parent=5 // pred_check_branch
        %693 = sbr.rel (%p691) target = $region48
      $region47: #{tpu_custom_call.1} parent=5 // pred_region
        %s694 = ssub.s32 %s14, 2
        // Predicated region
        $region49: #{tpu_custom_call.1} parent=47 // pred_check
          %p695 = pneg %p153
        $region50: #{tpu_custom_call.1} parent=47 // pred_check_branch
          %697 = sbr.rel (%p695) target = $region52
        $region51: #{tpu_custom_call.1} parent=47 // pred_region
          %s698 = sand.u32 %s138, 1
          %s699 = scalar_lea.sflag [#allocation3], %s698
          %s700 = sand.u32 %s138, 1
          %s701 = smul.addr %s700, 8
          %s702 = scalar_lea.vmem [#allocation2], %s701
          %703 = dma.done %s699, 128
        $region52: #{tpu_custom_call.1} parent=47 // pred_fallthru
          _
      $region48: #{tpu_custom_call.1} parent=5 // pred_fallthru
        _
    $region6: #{tpu_custom_call.1} parent=1 // loop_footer
      %s18 = sadd.s32 1, %s14
    $region7: #{tpu_custom_call.1} parent=1 // loop_footer_branch
      %13 = sbr.rel target = $region3
    $region8: #{tpu_custom_call.1} parent=1 // loop_exit
      _
    %704 = vsyncpa [#allocation3], 1
    %s705 = scalar_lea.sflag [#allocation3], 1
    %706 = vsyncpa %s705, 1

</llo_original>
